<compile_context>
chip_gen: v5e
topology: v5e:2x2
jax: 0.10.0
libtpu: 0.0.40
codegen_flags: <defaults>
</compile_context>

<pallas_src>
import functools

import numpy as np
import jax
import jax.numpy as jnp
from jax import lax
from jax.experimental import pallas as pl
from jax.experimental.pallas import tpu as pltpu


def _round_up(a, b):
    return -(-a // b) * b


def _usable_vmem_bytes():
    """Physical VMEM of the current generation minus headroom for Mosaic scratch."""
    try:
        cap = int(pltpu.get_tpu_info().vmem_capacity_bytes)
    except Exception:
        cap = 64 * 1024 * 1024        # conservative fallback (v7x per-TC VMEM)
    return int(cap * 0.8)


# ---------------------------------------------------------------------------
# Kernel A: streaming per-group segment sums of the raw embeddings.
# grid = (feature-column tiles ["parallel"], row tiles over N ["arbitrary"]).
# The (G, tile_d) f32 output block is resident across the N axis and acts as
# the accumulator (init at n == 0).
# ---------------------------------------------------------------------------
def _segment_sum_kernel(n_rows, idx_ref, x_ref, agg_ref):
    """idx_ref: (1, tile_n) int32; x_ref: (tile_n, tile_d); agg_ref: (G, tile_d) f32."""
    step = pl.program_id(1)

    @pl.when(step == 0)
    def _init():
        agg_ref[...] = jnp.zeros_like(agg_ref)

    g = agg_ref.shape[0]
    tile_n = x_ref.shape[0]

    x = x_ref[...]
    if n_rows % tile_n != 0:
        # Static check: only the ragged last tile needs masking.  Zeroing invalid
        # rows keeps possible non-finite garbage out of the MXU accumulation.
        row = step * tile_n + lax.broadcasted_iota(jnp.int32, (tile_n, 1), 0)
        x = jnp.where(row < n_rows, x, 0.0)

    groups = lax.broadcasted_iota(jnp.int32, (g, tile_n), 0)        # (G, tile_n)
    onehot = (idx_ref[...] == groups).astype(x.dtype)               # exact in bf16 too
    agg_ref[...] += jnp.dot(onehot, x, preferred_element_type=jnp.float32)


# ---------------------------------------------------------------------------
# Kernel B: out = (agg * inv_count) @ W^T + b, K-tiled over the feature dim.
# W is pre-transposed in the wrapper, so this is a plain NN matmul.
# ---------------------------------------------------------------------------
def _project_kernel(agg_ref, inv_ref, wt_ref, b_ref, o_ref, acc_ref):
    k = pl.program_id(0)

    @pl.when(k == 0)
    def _init():
        acc_ref[...] = jnp.zeros_like(acc_ref)

    mean_x = agg_ref[...] * inv_ref[...]                             # (G, tk) f32
    acc_ref[...] += jnp.dot(mean_x.astype(wt_ref.dtype), wt_ref[...],
                            preferred_element_type=jnp.float32)

    @pl.when(k == pl.num_programs(0) - 1)
    def _finalize():
        o_ref[...] = (acc_ref[...] + b_ref[...].astype(jnp.float32)).astype(o_ref.dtype)


def linear_combinator(embeddings, weight, bias, study_indexes, num_groups, *, tile_n=1024):
    """embeddings: (N, D); weight: (D, D) torch layout (y = x @ W.T + b); bias: (D,);
    study_indexes: (N,) ints in [0, num_groups); num_groups: static Python int.
    Returns (num_groups, D) per-study mean of Linear(embeddings)."""
    N, D = embeddings.shape
    G = int(num_groups)
    out_dtype = embeddings.dtype
    isz = embeddings.dtype.itemsize
    usable = _usable_vmem_bytes()

    # ---- feature-column tiling (gives v7x a megacore-parallel axis) --------
    if D % 256 == 0 and D >= 1024:
        num_d_tiles, tile_d = 2, D // 2            # tile_d stays a multiple of 128
    else:
        num_d_tiles, tile_d = 1, D

    # ---- row tiling over N (the streamed reduction axis) -------------------
    if N <= tile_n:
        tile_rows, grid_n = N, 1
    else:
        tile_rows = max(128, (tile_n // 128) * 128)
        grid_n = pl.cdiv(N, tile_rows)
        # Shrink the streamed tile if its double buffer would not fit in VMEM.
        while tile_rows > 128 and 3 * tile_rows * tile_d * isz > usable:
            tile_rows = max(128, tile_rows // 2)
            grid_n = pl.cdiv(N, tile_rows)

    # Index vector: pad with `G` so padded rows match no group (belt & suspenders
    # on top of the in-kernel ragged-row mask).  This array is tiny (4 B / row).
    n_padded = grid_n * tile_rows
    idx = study_indexes.astype(jnp.int32).reshape(1, N)
    if n_padded != N:
        idx = jnp.full((1, n_padded), G, dtype=jnp.int32).at[0, :N].set(idx[0])

    # ---- Kernel A: segment sums --------------------------------------------
    g_pad = _round_up(G, 8)
    f_a = (2 * tile_rows * tile_d * isz                      # x tile (double buffered)
           + 2 * 8 * _round_up(tile_rows, 128) * 4           # idx tile (sublane padded)
           + 2 * g_pad * _round_up(tile_d, 128) * 4)         # resident output block
    vmem_a = int(min(usable, max(32 * 1024 * 1024, 2 * f_a)))

    agg = pl.pallas_call(
        functools.partial(_segment_sum_kernel, N),
        out_shape=jax.ShapeDtypeStruct((G, D), jnp.float32),
        grid_spec=pltpu.PrefetchScalarGridSpec(
            num_scalar_prefetch=0,
            grid=(num_d_tiles, grid_n),
            in_specs=[
                pl.BlockSpec((1, tile_rows), lambda d, n: (0, n)),      # study ids (streamed)
                pl.BlockSpec((tile_rows, tile_d), lambda d, n: (n, d)),  # embeddings (streamed)
            ],
            out_specs=pl.BlockSpec((G, tile_d), lambda d, n: (0, d)),
        ),
        compiler_params=pltpu.CompilerParams(
            dimension_semantics=("parallel", "arbitrary"),   # N is the reduction axis
            vmem_limit_bytes=vmem_a,
        ),
    )(idx, embeddings)

    # ---- counts / exact reciprocal (outside the hot loop, exact f32) -------
    counts = jnp.bincount(study_indexes.astype(jnp.int32), length=G).astype(jnp.float32)
    # Empty-group guard: groups with no members return bias-only rows (the
    # torch reference assumes contiguous unique-derived ids, so this is benign).
    inv = (1.0 / jnp.maximum(counts, 1.0)).reshape(G, 1)

    # ---- Kernel B: (agg/cnt) @ W^T + b --------------------------------------
    w_t = jnp.asarray(weight).T                 # transpose once, in the wrapper
    b2 = jnp.asarray(bias).reshape(1, D)

    if D % 128 == 0 and D > 512:
        tk = 512 if D % 512 == 0 else (256 if D % 256 == 0 else 128)
    else:
        tk = D
    grid_k = D // tk

    f_b = (2 * g_pad * _round_up(tk, 128) * 4                     # agg K-slab (f32)
           + 2 * g_pad * 128 * 4                                  # inv counts
           + 2 * _round_up(tk, 8) * _round_up(D, 128) * w_t.dtype.itemsize   # W^T K-slab
           + 2 * 8 * _round_up(D, 128) * b2.dtype.itemsize        # bias
           + 2 * g_pad * _round_up(D, 128) * out_dtype.itemsize   # output block
           + g_pad * _round_up(D, 128) * 4)                       # f32 accumulator scratch
    vmem_b = int(min(usable, max(32 * 1024 * 1024, 2 * f_b)))

    out = pl.pallas_call(
        _project_kernel,
        out_shape=jax.ShapeDtypeStruct((G, D), out_dtype),
        grid_spec=pltpu.PrefetchScalarGridSpec(
            num_scalar_prefetch=0,
            grid=(grid_k,),
            in_specs=[
                pl.BlockSpec((G, tk), lambda k: (0, k)),   # segment sums (K-tiled)
                pl.BlockSpec((G, 1), lambda k: (0, 0)),    # 1 / counts
                pl.BlockSpec((tk, D), lambda k: (k, 0)),   # W^T (K-tiled)
                pl.BlockSpec((1, D), lambda k: (0, 0)),    # bias
            ],
            out_specs=pl.BlockSpec((G, D), lambda k: (0, 0)),
            scratch_shapes=[pltpu.VMEM((G, D), jnp.float32)],
        ),
        compiler_params=pltpu.CompilerParams(
            dimension_semantics=("arbitrary",),
            vmem_limit_bytes=vmem_b,
        ),
    )(agg, inv, w_t, b2)

    return out


if __name__ == "__main__":
    key = jax.random.PRNGKey(0)
    k_x, k_w, k_b = jax.random.split(key, 3)

    N = 8          # number of embeddings (e.g. images)
    D = 32         # dim_features

    embeddings = jax.random.normal(k_x, (N, D), dtype=jnp.float32)

    # Deterministic parameter init mimicking torch.nn.Linear default:
    # uniform(-1/sqrt(D), 1/sqrt(D)) for both weight and bias.
    bound = 1.0 / np.sqrt(D)
    weight = jax.random.uniform(k_w, (D, D), minval=-bound, maxval=bound, dtype=jnp.float32)
    bias = jax.random.uniform(k_b, (D,), minval=-bound, maxval=bound, dtype=jnp.float32)

    # Study indexes: which "study" each embedding belongs to.
    # torch.unique -> final_batch_size is computed host-side as a static int.
    study_indexes_np = np.array([0, 0, 1, 1, 1, 2, 2, 0], dtype=np.int32)
    num_groups = int(np.unique(study_indexes_np).shape[0])
    study_indexes = jnp.asarray(study_indexes_np)

    out = linear_combinator(embeddings, weight, bias, study_indexes, num_groups)
    out = jax.block_until_ready(out)

    # Pure-JAX reference in the ORIGINAL op order (linear then per-group mean).
    y_ref = embeddings @ weight.T + bias
    onehot = (study_indexes[None, :] == jnp.arange(num_groups)[:, None]).astype(jnp.float32)
    ref = (onehot @ y_ref) / jnp.sum(onehot, axis=1, keepdims=True)
    # Exact 1/count now; only f32 reassociation (aggregate-then-project) differs.
    np.testing.assert_allclose(np.asarray(out), np.asarray(ref), rtol=1e-5, atol=1e-5)

    print("KERNEL_OK")
</pallas_src>

<mosaic_0001>
module attributes {stable_mosaic.version = 11 : i64} {
  func.func @_segment_sum_kernel(%arg0: i32, %arg1: i32, %arg2: memref<1x8xi32, #tpu.memory_space<vmem>>, %arg3: memref<8x32xf32, #tpu.memory_space<vmem>>, %arg4: memref<3x32xf32, #tpu.memory_space<vmem>>) attributes {dimension_semantics = [#tpu.dimension_semantics<parallel>, #tpu.dimension_semantics<arbitrary>], iteration_bounds = array<i64: 1, 1>, scalar_prefetch = 0 : i64, scratch_operands = 0 : i64, tpu.core_type = #tpu.core_type<tc>, window_params = [{transform_indices = @transform_0, window_bounds = array<i64: 1, 8>}, {transform_indices = @transform_1, window_bounds = array<i64: 8, 32>}, {transform_indices = @transform_2, window_bounds = array<i64: 3, 32>}]} {
    %c0_i32 = arith.constant 0 : i32
    %0 = arith.cmpi eq, %arg1, %c0_i32 : i32
    %1 = arith.extui %0 : i1 to i32
    %c0_i32_0 = arith.constant 0 : i32
    %2 = arith.cmpi ne, %1, %c0_i32_0 : i32
    scf.if %2 {
      %cst_8 = arith.constant 0.000000e+00 : f32
      %14 = vector.broadcast %cst_8 : f32 to vector<3x32xf32>
      %c0_9 = arith.constant 0 : index
      %c0_10 = arith.constant 0 : index
      %15 = vector.load %arg4[%c0_9, %c0_10] : memref<3x32xf32, #tpu.memory_space<vmem>>, vector<3x32xf32>
      tpu.vector_store %arg4[%c0_9, %c0_10], %14 {strides = array<i32>} : memref<3x32xf32, #tpu.memory_space<vmem>>, vector<3x32xf32>,
    } else {
    }
    %c0 = arith.constant 0 : index
    %c0_1 = arith.constant 0 : index
    %3 = vector.load %arg3[%c0, %c0_1] : memref<8x32xf32, #tpu.memory_space<vmem>>, vector<8x32xf32>
    %4 = tpu.iota {dimensions = array<i32: 0>} : vector<3x8xi32>
    %c0_2 = arith.constant 0 : index
    %c0_3 = arith.constant 0 : index
    %5 = vector.load %arg2[%c0_2, %c0_3] : memref<1x8xi32, #tpu.memory_space<vmem>>, vector<1x8xi32>
    %6 = vector.broadcast %5 : vector<1x8xi32> to vector<3x8xi32>
    %7 = arith.cmpi eq, %6, %4 : vector<3x8xi32>
    %8 = arith.extui %7 : vector<3x8xi1> to vector<3x8xi32>
    %9 = arith.sitofp %8 : vector<3x8xi32> to vector<3x8xf32>
    %c0_4 = arith.constant 0 : index
    %c0_5 = arith.constant 0 : index
    %10 = vector.load %arg4[%c0_4, %c0_5] : memref<3x32xf32, #tpu.memory_space<vmem>>, vector<3x32xf32>
    %cst = arith.constant dense<0.000000e+00> : vector<3x32xf32>
    %11 = tpu.matmul %9, %3, %cst {dimension_numbers = #tpu.dot_dimension_numbers<[1], [0], [0], [1], [0, 0, 1, 1], [], []>} : vector<3x8xf32>, vector<8x32xf32>, vector<3x32xf32> -> vector<3x32xf32>
    %12 = arith.addf %10, %11 : vector<3x32xf32>
    %c0_6 = arith.constant 0 : index
    %c0_7 = arith.constant 0 : index
    %13 = vector.load %arg4[%c0_6, %c0_7] : memref<3x32xf32, #tpu.memory_space<vmem>>, vector<3x32xf32>
    tpu.vector_store %arg4[%c0_6, %c0_7], %12 {strides = array<i32>} : memref<3x32xf32, #tpu.memory_space<vmem>>, vector<3x32xf32>,
    return
  }
  func.func @transform_0(%arg0: i32, %arg1: i32) -> (i32, i32) {
    %c0_i32 = arith.constant 0 : i32
    %c0_i32_0 = arith.constant 0 : i32
    return %c0_i32, %arg1 : i32, i32
  }
  func.func @transform_1(%arg0: i32, %arg1: i32) -> (i32, i32) {
    %c0_i32 = arith.constant 0 : i32
    return %arg1, %arg0 : i32, i32
  }
  func.func @transform_2(%arg0: i32, %arg1: i32) -> (i32, i32) {
    %c0_i32 = arith.constant 0 : i32
    %c0_i32_0 = arith.constant 0 : i32
    return %c0_i32, %arg0 : i32, i32
  }
}

</mosaic_0001>

<llo_original>
// kernel: tpu_custom_call.1
$region0: #{tpu_custom_call.1}
  #allocation0 [shape = 'u32[]', space=smem, size = 0x4, offset = 0x4, fixed_abs, tag = 'smem constant byte address 0x4 - core index']
  #allocation1 [shape = 'u32[72,128]{1,0:T(1,128)}', space=vmem, size = 0x9000, scoped, tag = 'internal scratch']
  %s0 = inlined_call_operand.hbm [shape: s32[1,8], index: 0, kind: input, shape index: {}]
  %s1 = inlined_call_operand.hbm [shape: f32[8,32], index: 1, kind: input, shape index: {}]
  %s2 = inlined_call_operand.hbm [shape: f32[3,32], index: 2, kind: output, shape index: {}]
  %s3 = sld [smem:[#allocation0]]
  $region30: #{tpu_custom_call.1} parent=0
    _
  %s5 = ssub.s32 1, %s3
  %s6 = scalar_select 0, %s5, %s3
  $region1: #{tpu_custom_call.1} parent=0
    #allocation2 [shape = 'u8[512]{0}', space=vmem, size = 0x400, scoped, tag = 'input window, operand 0, single buffered']
    #allocation3 [shape = 's32[1]{0}', space=sflag, size = 0x4, scoped, tag = 'scoped memory for tpu_custom_call.1']
    #allocation4 [shape = 's32[1]{0}', space=sflag, size = 0x4, scoped, tag = 'scoped memory for tpu_custom_call.1']
    #allocation5 [shape = 'u8[4096]{0}', space=vmem, size = 0x1000, scoped, tag = 'input window, operand 1, single buffered']
    #allocation6 [shape = 's32[1]{0}', space=sflag, size = 0x4, scoped, tag = 'scoped memory for tpu_custom_call.1']
    #allocation7 [shape = 'u8[2048]{0}', space=vmem, size = 0x800, scoped, tag = 'output window, operand 0, single buffered']
    %7 = vsyncpa [#allocation3], 0
    %8 = vsyncpa [#allocation6], 0
    %9 = vsyncpa [#allocation4], 0
    // Predicated region
    $region2: #{tpu_custom_call.1} parent=1 // pred_check
      _
    $region3: #{tpu_custom_call.1} parent=1 // pred_check_branch
      %11 = sbr.rel (0) target = $region5
    $region4: #{tpu_custom_call.1} parent=1 // pred_region
      %13 = vsyncadd [#allocation3], 0
      %s15 = sshll.u32 %s0, 4
      %s16 = int_to_ptr.hbm [resolvable:$true] %s15
      %s17 = sshll.u32 [#allocation2], 4
      %s18 = int_to_ptr.vmem [resolvable:$true] %s17
      %20 = dma.hbm_to_vmem [thread:$0]  %s16, 16, %s18, [#allocation3]
    $region5: #{tpu_custom_call.1} parent=1 // pred_fallthru
      _
    // Predicated region
    $region6: #{tpu_custom_call.1} parent=1 // pred_check
      _
    $region7: #{tpu_custom_call.1} parent=1 // pred_check_branch
      %22 = sbr.rel (0) target = $region9
    $region8: #{tpu_custom_call.1} parent=1 // pred_region
      %24 = vsyncadd [#allocation6], 0
      %s26 = sshll.u32 %s1, 4
      %s27 = int_to_ptr.hbm [resolvable:$true] %s26
      %s28 = sshll.u32 [#allocation5], 4
      %s29 = int_to_ptr.vmem [resolvable:$true] %s28
      %31 = dma.hbm_to_vmem [thread:$0]  %s27, 128, %s29, [#allocation6]
    $region9: #{tpu_custom_call.1} parent=1 // pred_fallthru
      _
    // Predicated region
    $region10: #{tpu_custom_call.1} parent=1 // pred_check
      _
    $region11: #{tpu_custom_call.1} parent=1 // pred_check_branch
      %33 = sbr.rel (0) target = $region13
    $region12: #{tpu_custom_call.1} parent=1 // pred_region
      %35 = dma.done [#allocation3], 16
    $region13: #{tpu_custom_call.1} parent=1 // pred_fallthru
      _
    // Predicated region
    $region14: #{tpu_custom_call.1} parent=1 // pred_check
      _
    $region15: #{tpu_custom_call.1} parent=1 // pred_check_branch
      %37 = sbr.rel (0) target = $region17
    $region16: #{tpu_custom_call.1} parent=1 // pred_region
      %39 = dma.done [#allocation6], 128
    $region17: #{tpu_custom_call.1} parent=1 // pred_fallthru
      _
    %p40 = scmp.eq.s32.totalorder 0, 0
    // Predicated region
    $region18: #{tpu_custom_call.1} parent=1 // pred_check
      %p41 = pneg %p40
    $region19: #{tpu_custom_call.1} parent=1 // pred_check_branch
      %43 = sbr.rel (%p41) target = $region21
    $region20: #{tpu_custom_call.1} parent=1 // pred_region
      %vm44 = vcmask 256000
      %45 = vst.msk [vmem:[#allocation7] sm:$0x7] %vm44, 0.0
    $region21: #{tpu_custom_call.1} parent=1 // pred_fallthru
      _
    %v46 = vld [vmem:[#allocation5] sm:$0xff]
    %v47 = vlaneseq
    %v48 = vshrl.u32 %v47, 7
    %v49 = vld [vmem:[#allocation2] sm:$0x1]
    %v50 = vperm.slane %v49, 0
    %vm51 = vcmp.eq.s32.totalorder %v50, %v48
    %v52 = vsel %vm51, 1, 0
    %v53 = vcvt.s32.f32 %v52
    %v54 = vld [vmem:[#allocation7] sm:$0x7]
    %vm55 = vcmask 64512
    %v57 = vsel %vm55, %v53, 0
    %59 = vmatpush.msra.mxu0 0.0
    %60 = vmatpush.msra.mxu0 0.0
    %61 = vmatpush.msra.mxu0 0.0
    %62 = vmatpush.msra.mxu0 0.0
    %63 = vmatpush.msra.mxu0 0.0
    %64 = vmatpush.msra.mxu0 0.0
    %65 = vmatpush.msra.mxu0 0.0
    %66 = vmatpush.msra.mxu0 0.0
    %67 = vmatpush.msra.mxu0 0.0
    %68 = vmatpush.msra.mxu0 0.0
    %69 = vmatpush.msra.mxu0 0.0
    %70 = vmatpush.msra.mxu0 0.0
    %71 = vmatpush.msra.mxu0 0.0
    %72 = vmatpush.msra.mxu0 0.0
    %73 = vmatpush.msra.mxu0 0.0
    %74 = vmatpush.msra.mxu0 %v46
    %75 = vmatmul.f32.gmra.mxu0 %v57
    %v76 = vpop.f32.mrf.mxu0
    %v77 = vadd.f32 0.0, %v76
    %78 = vdwg.mxu0
    %v79 = vadd.f32 %v54, %v77
    %vm80 = vcmask 256000
    %81 = vst.msk [vmem:[#allocation7] sm:$0x7] %vm80, %v79
    // Predicated region
    $region22: #{tpu_custom_call.1} parent=1 // pred_check
      _
    $region23: #{tpu_custom_call.1} parent=1 // pred_check_branch
      %83 = sbr.rel (0) target = $region25
    $region24: #{tpu_custom_call.1} parent=1 // pred_region
      %85 = vsyncadd [#allocation4], 0
      %s87 = sshll.u32 [#allocation7], 4
      %s88 = int_to_ptr.vmem [resolvable:$true] %s87
      %s89 = sshll.u32 %s2, 4
      %s90 = int_to_ptr.hbm [resolvable:$true] %s89
      %92 = dma.vmem_to_hbm [thread:$0]  %s88, 64, %s90, [#allocation4]
    $region25: #{tpu_custom_call.1} parent=1 // pred_fallthru
      _
    // Predicated region
    $region26: #{tpu_custom_call.1} parent=1 // pred_check
      _
    $region27: #{tpu_custom_call.1} parent=1 // pred_check_branch
      %94 = sbr.rel (0) target = $region29
    $region28: #{tpu_custom_call.1} parent=1 // pred_region
      %96 = dma.done [#allocation4], 64
    $region29: #{tpu_custom_call.1} parent=1 // pred_fallthru
      _
    %97 = vsyncpa [#allocation3], 1
    %98 = vsyncpa [#allocation6], 1
    %99 = vsyncpa [#allocation4], 1

</llo_original>
